<compile_context>
chip_gen: v6e
topology: v6e:2x2x1
jax: 0.10.0
libtpu: 0.0.40
codegen_flags: <defaults>
</compile_context>

<pallas_src>
import jax
import jax.numpy as jnp
from jax.experimental import pallas as pl
from jax.experimental.pallas import tpu as pltpu


def _round_up(x, m):
    return ((x + m - 1) // m) * m


# ----------------------------------------------------------------------------
# Pallas kernel: folded head matmul (1536 -> 64) + ReLU + 64->32 + ReLU + 32->2.
# ----------------------------------------------------------------------------
def head_kernel(x_ref,
                wf_ref, bf_ref,
                w2_ref, b2_ref,
                w3_ref, b3_ref,
                out_ref):
    x = x_ref[...]                                                    # (TB, 1536) bf16

    # h1 = ReLU( cat([TN(x), FC(x)], 1) @ W1 + b1 )  with the linear head folded:
    #   x @ (wcat @ W1) + (bcat @ W1 + b1)
    h1 = jnp.dot(x, wf_ref[...], preferred_element_type=jnp.float32) + bf_ref[...]
    h1 = jnp.maximum(h1, 0.0)                                         # (TB, 64) f32

    h2 = jnp.dot(h1.astype(jnp.bfloat16), w2_ref[...],
                 preferred_element_type=jnp.float32) + b2_ref[...]
    h2 = jnp.maximum(h2, 0.0)                                         # (TB, 32) f32

    out_ref[...] = (jnp.dot(h2.astype(jnp.bfloat16), w3_ref[...],
                            preferred_element_type=jnp.float32)
                    + b3_ref[...])                                    # (TB, 2) f32


def _choose_tile(B, desired):
    # Balance the tile so (a) padding is at most one 16-row bf16 sublane group,
    # (b) when B is big enough, there are >= 2 grid steps so the "parallel"
    # axis shards across v7x's 2 TensorCores (no-op on v5e/v6e).
    n_steps = max(pl.cdiv(B, desired), 2 if B >= 32 else 1)
    return _round_up(pl.cdiv(B, n_steps), 16)


def res_tn_fc_head(x2d, params, desired_tile_b=1024):
    """x2d: (B, 1536) bf16.  params: packed/folded weights.  Returns (B, 2) f32."""
    B, K = x2d.shape
    wf, bf, w2, b2, w3, b3 = params
    n1, n2, n_out = wf.shape[1], w2.shape[1], w3.shape[1]

    tile_b = _choose_tile(B, desired_tile_b)
    Bp = _round_up(B, tile_b)
    if Bp != B:
        x2d = jnp.pad(x2d, ((0, Bp - B), (0, 0)))
    grid = (Bp // tile_b,)

    def weight_spec(a):
        # Constant block index -> loaded once, VMEM-resident across grid steps.
        return pl.BlockSpec(a.shape, lambda i: (0, 0))

    flops = 2 * Bp * (K * n1 + n1 * n2 + n2 * n_out)
    bytes_accessed = (Bp * K * x2d.dtype.itemsize
                      + sum(int(p.size) * p.dtype.itemsize for p in params)
                      + Bp * n_out * 4)

    # Double-buffered x tiles + out tiles + resident weights, with headroom;
    # keeps v5e (16 MiB scoped default) happy for big tiles, stays < v7x's 64 MiB.
    vmem_bytes = (2 * tile_b * K * x2d.dtype.itemsize
                  + 2 * tile_b * n_out * 4
                  + 2 * sum(int(p.size) * p.dtype.itemsize for p in params)
                  + (8 << 20))
    vmem_bytes = min(max(vmem_bytes, 16 << 20), 48 << 20)

    out = pl.pallas_call(
        head_kernel,
        out_shape=jax.ShapeDtypeStruct((Bp, n_out), jnp.float32),
        grid=grid,
        in_specs=[pl.BlockSpec((tile_b, K), lambda i: (i, 0))]
                 + [weight_spec(p) for p in params],
        out_specs=pl.BlockSpec((tile_b, n_out), lambda i: (i, 0)),
        compiler_params=pltpu.CompilerParams(
            dimension_semantics=("parallel",),
            vmem_limit_bytes=int(vmem_bytes)),
        cost_estimate=pl.CostEstimate(flops=flops, transcendentals=0,
                                      bytes_accessed=bytes_accessed),
    )(x2d, *params)
    return out[:B]


# ----------------------------------------------------------------------------
# Backbone stand-in (plain-JAX glue).
# ----------------------------------------------------------------------------
def res_standin(img, w_proj):
    # TODO(synk): resnet50 body is not included in the provided module; replaced by a
    # deterministic stand-in (8x8-grid average pool + 1x1 channel projection 3 -> 24)
    # that produces the (B, 24, 8, 8) feature map the TN/FC heads expect.
    B, C, H, W = img.shape
    pooled = img.reshape(B, C, 8, H // 8, 8, W // 8).mean(axis=(3, 5))   # (B, 3, 8, 8)
    return jnp.einsum('bchw,ck->bkhw', pooled, w_proj)                   # (B, 24, 8, 8)


# ----------------------------------------------------------------------------
# One-time parameter packing (hoisted out of the forward path).
# ----------------------------------------------------------------------------
def pack_params(weights):
    (w_proj, w_tn, b_tn, w_fc, b_fc, w1, b1, w2, b2, w3, b3) = weights

    # TODO(synk): TN(b, 24, 8, 8, 64, method=1) tensor-network contraction is not
    # defined in the provided module; its column block of wcat is a linear stand-in,
    # which is what makes the Linear(128, 64) fold below exact.
    wcat = jnp.concatenate([w_tn, w_fc], axis=1)       # (1536, 128) f32
    bcat = jnp.concatenate([b_tn, b_fc], axis=1)       # (1, 128)    f32

    # Fold final's Linear(128, 64) into the head matmul (fp32 fold, bf16 cast after).
    w_fused = wcat @ w1                                # (1536, 64) f32
    b_fused = bcat @ w1 + b1                           # (1, 64)    f32

    params = (w_fused.astype(jnp.bfloat16), b_fused,
              w2.astype(jnp.bfloat16), b2,
              w3.astype(jnp.bfloat16), b3)
    return w_proj, params


def res_tn_fc_forward(img, w_proj, params):
    x = res_standin(img, w_proj)                       # (B, 24, 8, 8)  NCHW
    x2d = x.reshape(x.shape[0], -1)                    # (B, 1536)  torch .view(B, -1) order
    return res_tn_fc_head(x2d.astype(jnp.bfloat16), params)


# ----------------------------------------------------------------------------
# Deterministic parameter construction + run
# ----------------------------------------------------------------------------
def make_weights(key):
    ks = jax.random.split(key, 11)

    def lin(k, fan_in, fan_out):
        return jax.random.normal(k, (fan_in, fan_out), jnp.float32) * (1.0 / jnp.sqrt(fan_in))

    w_proj = lin(ks[0], 3, 24)                        # stand-in 1x1 conv 3 -> 24
    w_tn = lin(ks[1], 1536, 64)                       # TN stand-in
    b_tn = jnp.zeros((1, 64), jnp.float32)
    w_fc = lin(ks[2], 1536, 64)                       # FC(24, 8, 8, 64)
    b_fc = jnp.zeros((1, 64), jnp.float32)
    w1 = lin(ks[3], 128, 64)                          # final: Linear(128, 64)
    b1 = jnp.zeros((1, 64), jnp.float32)
    w2 = lin(ks[4], 64, 32)                           # Linear(64, 32)
    b2 = jnp.zeros((1, 32), jnp.float32)
    w3 = lin(ks[5], 32, 2)                            # Linear(32, 2)
    b3 = jnp.zeros((1, 2), jnp.float32)
    return (w_proj, w_tn, b_tn, w_fc, b_fc, w1, b1, w2, b2, w3, b3)


if __name__ == "__main__":
    key = jax.random.PRNGKey(0)
    k_img, k_w = jax.random.split(key)
    img = jax.random.normal(k_img, (2, 3, 32, 32), jnp.float32)   # NCHW
    weights = make_weights(k_w)

    # One-time packing (concat + fp32 fold + bf16 casts), outside the forward path.
    w_proj, params = pack_params(weights)

    out = res_tn_fc_forward(img, w_proj, params)
    out = jax.block_until_ready(out)
    assert out.shape == (2, 2), out.shape

    # Pure-JAX fp32 reference of the same module math (unfused, cat order preserved).
    x = res_standin(img, weights[0]).reshape(2, -1)
    tn = x @ weights[1] + weights[2]
    fc = x @ weights[3] + weights[4]
    z = jnp.concatenate([tn, fc], axis=1)
    h1 = jnp.maximum(z @ weights[5] + weights[6], 0.0)
    h2 = jnp.maximum(h1 @ weights[7] + weights[8], 0.0)
    ref = h2 @ weights[9] + weights[10]
    # bf16 operands (fp32 accumulation) -> loosened tolerance.
    assert jnp.allclose(out, ref, atol=5e-2, rtol=5e-2), (out, ref)

    print("KERNEL_OK")
</pallas_src>

<mosaic_0001>
module attributes {stable_mosaic.version = 11 : i64} {
  func.func @head_kernel(%arg0: i32, %arg1: memref<16x1536xbf16, #tpu.memory_space<vmem>>, %arg2: memref<1536x64xbf16, #tpu.memory_space<vmem>>, %arg3: memref<1x64xf32, #tpu.memory_space<vmem>>, %arg4: memref<64x32xbf16, #tpu.memory_space<vmem>>, %arg5: memref<1x32xf32, #tpu.memory_space<vmem>>, %arg6: memref<32x2xbf16, #tpu.memory_space<vmem>>, %arg7: memref<1x2xf32, #tpu.memory_space<vmem>>, %arg8: memref<16x2xf32, #tpu.memory_space<vmem>>) attributes {dimension_semantics = [#tpu.dimension_semantics<parallel>], iteration_bounds = array<i64: 1>, scalar_prefetch = 0 : i64, scratch_operands = 0 : i64, tpu.core_type = #tpu.core_type<tc>, window_params = [{transform_indices = @transform_0, window_bounds = array<i64: 16, 1536>}, {pipeline_mode = #tpu.pipeline_mode<synchronous>, transform_indices = @transform_1, window_bounds = array<i64: 1536, 64>}, {pipeline_mode = #tpu.pipeline_mode<synchronous>, transform_indices = @transform_2, window_bounds = array<i64: 1, 64>}, {pipeline_mode = #tpu.pipeline_mode<synchronous>, transform_indices = @transform_3, window_bounds = array<i64: 64, 32>}, {pipeline_mode = #tpu.pipeline_mode<synchronous>, transform_indices = @transform_4, window_bounds = array<i64: 1, 32>}, {pipeline_mode = #tpu.pipeline_mode<synchronous>, transform_indices = @transform_5, window_bounds = array<i64: 32, 2>}, {pipeline_mode = #tpu.pipeline_mode<synchronous>, transform_indices = @transform_6, window_bounds = array<i64: 1, 2>}, {transform_indices = @transform_7, window_bounds = array<i64: 16, 2>}]} {
    %c0 = arith.constant 0 : index
    %c0_0 = arith.constant 0 : index
    %0 = vector.load %arg1[%c0, %c0_0] : memref<16x1536xbf16, #tpu.memory_space<vmem>>, vector<16x1536xbf16>
    %c0_1 = arith.constant 0 : index
    %c0_2 = arith.constant 0 : index
    %1 = vector.load %arg2[%c0_1, %c0_2] : memref<1536x64xbf16, #tpu.memory_space<vmem>>, vector<1536x64xbf16>
    %cst = arith.constant dense<0.000000e+00> : vector<16x64xf32>
    %2 = tpu.matmul %0, %1, %cst {dimension_numbers = #tpu.dot_dimension_numbers<[1], [0], [0], [1], [0, 0, 1, 1], [], []>} : vector<16x1536xbf16>, vector<1536x64xbf16>, vector<16x64xf32> -> vector<16x64xf32>
    %c0_3 = arith.constant 0 : index
    %c0_4 = arith.constant 0 : index
    %3 = vector.load %arg3[%c0_3, %c0_4] : memref<1x64xf32, #tpu.memory_space<vmem>>, vector<1x64xf32>
    %4 = vector.broadcast %3 : vector<1x64xf32> to vector<16x64xf32>
    %5 = arith.addf %2, %4 : vector<16x64xf32>
    %cst_5 = arith.constant 0.000000e+00 : f32
    %6 = vector.broadcast %cst_5 : f32 to vector<16x64xf32>
    %7 = arith.maximumf %5, %6 : vector<16x64xf32>
    %8 = arith.truncf %7 : vector<16x64xf32> to vector<16x64xbf16>
    %c0_6 = arith.constant 0 : index
    %c0_7 = arith.constant 0 : index
    %9 = vector.load %arg4[%c0_6, %c0_7] : memref<64x32xbf16, #tpu.memory_space<vmem>>, vector<64x32xbf16>
    %cst_8 = arith.constant dense<0.000000e+00> : vector<16x32xf32>
    %10 = tpu.matmul %8, %9, %cst_8 {dimension_numbers = #tpu.dot_dimension_numbers<[1], [0], [0], [1], [0, 0, 1, 1], [], []>} : vector<16x64xbf16>, vector<64x32xbf16>, vector<16x32xf32> -> vector<16x32xf32>
    %c0_9 = arith.constant 0 : index
    %c0_10 = arith.constant 0 : index
    %11 = vector.load %arg5[%c0_9, %c0_10] : memref<1x32xf32, #tpu.memory_space<vmem>>, vector<1x32xf32>
    %12 = vector.broadcast %11 : vector<1x32xf32> to vector<16x32xf32>
    %13 = arith.addf %10, %12 : vector<16x32xf32>
    %cst_11 = arith.constant 0.000000e+00 : f32
    %14 = vector.broadcast %cst_11 : f32 to vector<16x32xf32>
    %15 = arith.maximumf %13, %14 : vector<16x32xf32>
    %16 = arith.truncf %15 : vector<16x32xf32> to vector<16x32xbf16>
    %c0_12 = arith.constant 0 : index
    %c0_13 = arith.constant 0 : index
    %17 = vector.load %arg6[%c0_12, %c0_13] : memref<32x2xbf16, #tpu.memory_space<vmem>>, vector<32x2xbf16>
    %cst_14 = arith.constant dense<0.000000e+00> : vector<16x2xf32>
    %18 = tpu.matmul %16, %17, %cst_14 {dimension_numbers = #tpu.dot_dimension_numbers<[1], [0], [0], [1], [0, 0, 1, 1], [], []>} : vector<16x32xbf16>, vector<32x2xbf16>, vector<16x2xf32> -> vector<16x2xf32>
    %c0_15 = arith.constant 0 : index
    %c0_16 = arith.constant 0 : index
    %19 = vector.load %arg7[%c0_15, %c0_16] : memref<1x2xf32, #tpu.memory_space<vmem>>, vector<1x2xf32>
    %20 = vector.broadcast %19 : vector<1x2xf32> to vector<16x2xf32>
    %21 = arith.addf %18, %20 : vector<16x2xf32>
    %c0_17 = arith.constant 0 : index
    %c0_18 = arith.constant 0 : index
    %22 = vector.load %arg8[%c0_17, %c0_18] : memref<16x2xf32, #tpu.memory_space<vmem>>, vector<16x2xf32>
    tpu.vector_store %arg8[%c0_17, %c0_18], %21 {strides = array<i32>} : memref<16x2xf32, #tpu.memory_space<vmem>>, vector<16x2xf32>,
    return
  }
  func.func @transform_0(%arg0: i32) -> (i32, i32) {
    %c0_i32 = arith.constant 0 : i32
    %c0_i32_0 = arith.constant 0 : i32
    return %arg0, %c0_i32 : i32, i32
  }
  func.func @transform_1(%arg0: i32) -> (i32, i32) {
    %c0_i32 = arith.constant 0 : i32
    %c0_i32_0 = arith.constant 0 : i32
    %c0_i32_1 = arith.constant 0 : i32
    return %c0_i32, %c0_i32_0 : i32, i32
  }
  func.func @transform_2(%arg0: i32) -> (i32, i32) {
    %c0_i32 = arith.constant 0 : i32
    %c0_i32_0 = arith.constant 0 : i32
    %c0_i32_1 = arith.constant 0 : i32
    return %c0_i32, %c0_i32_0 : i32, i32
  }
  func.func @transform_3(%arg0: i32) -> (i32, i32) {
    %c0_i32 = arith.constant 0 : i32
    %c0_i32_0 = arith.constant 0 : i32
    %c0_i32_1 = arith.constant 0 : i32
    return %c0_i32, %c0_i32_0 : i32, i32
  }
  func.func @transform_4(%arg0: i32) -> (i32, i32) {
    %c0_i32 = arith.constant 0 : i32
    %c0_i32_0 = arith.constant 0 : i32
    %c0_i32_1 = arith.constant 0 : i32
    return %c0_i32, %c0_i32_0 : i32, i32
  }
  func.func @transform_5(%arg0: i32) -> (i32, i32) {
    %c0_i32 = arith.constant 0 : i32
    %c0_i32_0 = arith.constant 0 : i32
    %c0_i32_1 = arith.constant 0 : i32
    return %c0_i32, %c0_i32_0 : i32, i32
  }
  func.func @transform_6(%arg0: i32) -> (i32, i32) {
    %c0_i32 = arith.constant 0 : i32
    %c0_i32_0 = arith.constant 0 : i32
    %c0_i32_1 = arith.constant 0 : i32
    return %c0_i32, %c0_i32_0 : i32, i32
  }
  func.func @transform_7(%arg0: i32) -> (i32, i32) {
    %c0_i32 = arith.constant 0 : i32
    %c0_i32_0 = arith.constant 0 : i32
    return %arg0, %c0_i32 : i32, i32
  }
}

</mosaic_0001>

<llo_original>
// kernel: tpu_custom_call.1
$region0: #{tpu_custom_call.1}
  #allocation0 [shape = 'u32[]', space=smem, size = 0x4, offset = 0x4, fixed_abs, tag = 'smem constant byte address 0x4 - core index']
  #allocation1 [shape = 'u32[144,128]{1,0:T(1,128)}', space=vmem, size = 0x12000, scoped, tag = 'internal scratch']
  %s0 = inlined_call_operand.vmem [shape: bf16[16,1536], index: 0, kind: input, shape index: {}]
  %s1 = inlined_call_operand.vmem [shape: bf16[1536,64], index: 1, kind: input, shape index: {}]
  %s2 = inlined_call_operand.vmem [shape: f32[1,64], index: 2, kind: input, shape index: {}]
  %s3 = inlined_call_operand.vmem [shape: bf16[64,32], index: 3, kind: input, shape index: {}]
  %s4 = inlined_call_operand.vmem [shape: f32[1,32], index: 4, kind: input, shape index: {}]
  %s5 = inlined_call_operand.vmem [shape: bf16[32,2], index: 5, kind: input, shape index: {}]
  %s6 = inlined_call_operand.vmem [shape: f32[1,2], index: 6, kind: input, shape index: {}]
  %s7 = inlined_call_operand.vmem [shape: f32[16,2], index: 7, kind: output, shape index: {}]
  %s8 = sld [smem:[#allocation0]]
  $region38: #{tpu_custom_call.1} parent=0
    _
  %s10 = ssub.s32 1, %s8
  %s11 = scalar_select 0, %s10, %s8
  // Predicated region
  $region2: #{tpu_custom_call.1} parent=0 // pred_check
    _
  $region3: #{tpu_custom_call.1} parent=0 // pred_check_branch
    %13 = sbr.rel (0) target = $region5
  $region4: #{tpu_custom_call.1} parent=0 // pred_region
    _
  $region5: #{tpu_custom_call.1} parent=0 // pred_fallthru
    _
  // Predicated region
  $region6: #{tpu_custom_call.1} parent=0 // pred_check
    _
  $region7: #{tpu_custom_call.1} parent=0 // pred_check_branch
    %15 = sbr.rel (0) target = $region9
  $region8: #{tpu_custom_call.1} parent=0 // pred_region
    _
  $region9: #{tpu_custom_call.1} parent=0 // pred_fallthru
    _
  // Predicated region
  $region10: #{tpu_custom_call.1} parent=0 // pred_check
    _
  $region11: #{tpu_custom_call.1} parent=0 // pred_check_branch
    %17 = sbr.rel (0) target = $region13
  $region12: #{tpu_custom_call.1} parent=0 // pred_region
    _
  $region13: #{tpu_custom_call.1} parent=0 // pred_fallthru
    _
  // Predicated region
  $region14: #{tpu_custom_call.1} parent=0 // pred_check
    _
  $region15: #{tpu_custom_call.1} parent=0 // pred_check_branch
    %19 = sbr.rel (0) target = $region17
  $region16: #{tpu_custom_call.1} parent=0 // pred_region
    _
  $region17: #{tpu_custom_call.1} parent=0 // pred_fallthru
    _
  // Predicated region
  $region18: #{tpu_custom_call.1} parent=0 // pred_check
    _
  $region19: #{tpu_custom_call.1} parent=0 // pred_check_branch
    %21 = sbr.rel (0) target = $region21
  $region20: #{tpu_custom_call.1} parent=0 // pred_region
    _
  $region21: #{tpu_custom_call.1} parent=0 // pred_fallthru
    _
  // Predicated region
  $region22: #{tpu_custom_call.1} parent=0 // pred_check
    _
  $region23: #{tpu_custom_call.1} parent=0 // pred_check_branch
    %23 = sbr.rel (0) target = $region25
  $region24: #{tpu_custom_call.1} parent=0 // pred_region
    _
  $region25: #{tpu_custom_call.1} parent=0 // pred_fallthru
    _
  // Predicated region
  $region26: #{tpu_custom_call.1} parent=0 // pred_check
    _
  $region27: #{tpu_custom_call.1} parent=0 // pred_check_branch
    %25 = sbr.rel (0) target = $region29
  $region28: #{tpu_custom_call.1} parent=0 // pred_region
    _
  $region29: #{tpu_custom_call.1} parent=0 // pred_fallthru
    _
  %v27 = vld [vmem:[%s0] sm:$0xff]
  %v28 = vld [vmem:[%s0 + $0x8] sm:$0xff]
  %v29 = vld [vmem:[%s0 + $0x10] sm:$0xff]
  %v30 = vld [vmem:[%s0 + $0x18] sm:$0xff]
  %v31 = vld [vmem:[%s0 + $0x20] sm:$0xff]
  %v32 = vld [vmem:[%s0 + $0x28] sm:$0xff]
  %v33 = vld [vmem:[%s0 + $0x30] sm:$0xff]
  %v34 = vld [vmem:[%s0 + $0x38] sm:$0xff]
  %v35 = vld [vmem:[%s0 + $0x40] sm:$0xff]
  %v36 = vld [vmem:[%s0 + $0x48] sm:$0xff]
  %v37 = vld [vmem:[%s0 + $0x50] sm:$0xff]
  %v38 = vld [vmem:[%s0 + $0x58] sm:$0xff]
  %v39 = vld [vmem:[%s1] sm:$0xf]
  %v40 = vld [vmem:[%s1 + $0x4] sm:$0xf]
  %v41 = vld [vmem:[%s1 + $0x8] sm:$0xf]
  %v42 = vld [vmem:[%s1 + $0xc] sm:$0xf]
  %v43 = vld [vmem:[%s1 + $0x10] sm:$0xf]
  %v44 = vld [vmem:[%s1 + $0x14] sm:$0xf]
  %v45 = vld [vmem:[%s1 + $0x18] sm:$0xf]
  %v46 = vld [vmem:[%s1 + $0x1c] sm:$0xf]
  %v47 = vld [vmem:[%s1 + $0x20] sm:$0xf]
  %v48 = vld [vmem:[%s1 + $0x24] sm:$0xf]
  %v49 = vld [vmem:[%s1 + $0x28] sm:$0xf]
  %v50 = vld [vmem:[%s1 + $0x2c] sm:$0xf]
  %v51 = vld [vmem:[%s1 + $0x30] sm:$0xf]
  %v52 = vld [vmem:[%s1 + $0x34] sm:$0xf]
  %v53 = vld [vmem:[%s1 + $0x38] sm:$0xf]
  %v54 = vld [vmem:[%s1 + $0x3c] sm:$0xf]
  %v55 = vld [vmem:[%s1 + $0x40] sm:$0xf]
  %v56 = vld [vmem:[%s1 + $0x44] sm:$0xf]
  %v57 = vld [vmem:[%s1 + $0x48] sm:$0xf]
  %v58 = vld [vmem:[%s1 + $0x4c] sm:$0xf]
  %v59 = vld [vmem:[%s1 + $0x50] sm:$0xf]
  %v60 = vld [vmem:[%s1 + $0x54] sm:$0xf]
  %v61 = vld [vmem:[%s1 + $0x58] sm:$0xf]
  %v62 = vld [vmem:[%s1 + $0x5c] sm:$0xf]
  %v63 = vld [vmem:[%s1 + $0x60] sm:$0xf]
  %v64 = vld [vmem:[%s1 + $0x64] sm:$0xf]
  %v65 = vld [vmem:[%s1 + $0x68] sm:$0xf]
  %v66 = vld [vmem:[%s1 + $0x6c] sm:$0xf]
  %v67 = vld [vmem:[%s1 + $0x70] sm:$0xf]
  %v68 = vld [vmem:[%s1 + $0x74] sm:$0xf]
  %v69 = vld [vmem:[%s1 + $0x78] sm:$0xf]
  %v70 = vld [vmem:[%s1 + $0x7c] sm:$0xf]
  %v71 = vld [vmem:[%s1 + $0x80] sm:$0xf]
  %v72 = vld [vmem:[%s1 + $0x84] sm:$0xf]
  %v73 = vld [vmem:[%s1 + $0x88] sm:$0xf]
  %v74 = vld [vmem:[%s1 + $0x8c] sm:$0xf]
  %v75 = vld [vmem:[%s1 + $0x90] sm:$0xf]
  %v76 = vld [vmem:[%s1 + $0x94] sm:$0xf]
  %v77 = vld [vmem:[%s1 + $0x98] sm:$0xf]
  %v78 = vld [vmem:[%s1 + $0x9c] sm:$0xf]
  %v79 = vld [vmem:[%s1 + $0xa0] sm:$0xf]
  %v80 = vld [vmem:[%s1 + $0xa4] sm:$0xf]
  %v81 = vld [vmem:[%s1 + $0xa8] sm:$0xf]
  %v82 = vld [vmem:[%s1 + $0xac] sm:$0xf]
  %v83 = vld [vmem:[%s1 + $0xb0] sm:$0xf]
  %v84 = vld [vmem:[%s1 + $0xb4] sm:$0xf]
  %v85 = vld [vmem:[%s1 + $0xb8] sm:$0xf]
  %v86 = vld [vmem:[%s1 + $0xbc] sm:$0xf]
  %v87 = vld [vmem:[%s1 + $0xc0] sm:$0xf]
  %v88 = vld [vmem:[%s1 + $0xc4] sm:$0xf]
  %v89 = vld [vmem:[%s1 + $0xc8] sm:$0xf]
  %v90 = vld [vmem:[%s1 + $0xcc] sm:$0xf]
  %v91 = vld [vmem:[%s1 + $0xd0] sm:$0xf]
  %v92 = vld [vmem:[%s1 + $0xd4] sm:$0xf]
  %v93 = vld [vmem:[%s1 + $0xd8] sm:$0xf]
  %v94 = vld [vmem:[%s1 + $0xdc] sm:$0xf]
  %v95 = vld [vmem:[%s1 + $0xe0] sm:$0xf]
  %v96 = vld [vmem:[%s1 + $0xe4] sm:$0xf]
  %v97 = vld [vmem:[%s1 + $0xe8] sm:$0xf]
  %v98 = vld [vmem:[%s1 + $0xec] sm:$0xf]
  %v99 = vld [vmem:[%s1 + $0xf0] sm:$0xf]
  %v100 = vld [vmem:[%s1 + $0xf4] sm:$0xf]
  %v101 = vld [vmem:[%s1 + $0xf8] sm:$0xf]
  %v102 = vld [vmem:[%s1 + $0xfc] sm:$0xf]
  %v103 = vld [vmem:[%s1 + $0x100] sm:$0xf]
  %v104 = vld [vmem:[%s1 + $0x104] sm:$0xf]
  %v105 = vld [vmem:[%s1 + $0x108] sm:$0xf]
  %v106 = vld [vmem:[%s1 + $0x10c] sm:$0xf]
  %v107 = vld [vmem:[%s1 + $0x110] sm:$0xf]
  %v108 = vld [vmem:[%s1 + $0x114] sm:$0xf]
  %v109 = vld [vmem:[%s1 + $0x118] sm:$0xf]
  %v110 = vld [vmem:[%s1 + $0x11c] sm:$0xf]
  %v111 = vld [vmem:[%s1 + $0x120] sm:$0xf]
  %v112 = vld [vmem:[%s1 + $0x124] sm:$0xf]
  %v113 = vld [vmem:[%s1 + $0x128] sm:$0xf]
  %v114 = vld [vmem:[%s1 + $0x12c] sm:$0xf]
  %v115 = vld [vmem:[%s1 + $0x130] sm:$0xf]
  %v116 = vld [vmem:[%s1 + $0x134] sm:$0xf]
  %v117 = vld [vmem:[%s1 + $0x138] sm:$0xf]
  %v118 = vld [vmem:[%s1 + $0x13c] sm:$0xf]
  %v119 = vld [vmem:[%s1 + $0x140] sm:$0xf]
  %v120 = vld [vmem:[%s1 + $0x144] sm:$0xf]
  %v121 = vld [vmem:[%s1 + $0x148] sm:$0xf]
  %v122 = vld [vmem:[%s1 + $0x14c] sm:$0xf]
  %v123 = vld [vmem:[%s1 + $0x150] sm:$0xf]
  %v124 = vld [vmem:[%s1 + $0x154] sm:$0xf]
  %v125 = vld [vmem:[%s1 + $0x158] sm:$0xf]
  %v126 = vld [vmem:[%s1 + $0x15c] sm:$0xf]
  %v127 = vld [vmem:[%s1 + $0x160] sm:$0xf]
  %v128 = vld [vmem:[%s1 + $0x164] sm:$0xf]
  %v129 = vld [vmem:[%s1 + $0x168] sm:$0xf]
  %v130 = vld [vmem:[%s1 + $0x16c] sm:$0xf]
  %v131 = vld [vmem:[%s1 + $0x170] sm:$0xf]
  %v132 = vld [vmem:[%s1 + $0x174] sm:$0xf]
  %v133 = vld [vmem:[%s1 + $0x178] sm:$0xf]
  %v134 = vld [vmem:[%s1 + $0x17c] sm:$0xf]
  %v135 = vld [vmem:[%s1 + $0x180] sm:$0xf]
  %v136 = vld [vmem:[%s1 + $0x184] sm:$0xf]
  %v137 = vld [vmem:[%s1 + $0x188] sm:$0xf]
  %v138 = vld [vmem:[%s1 + $0x18c] sm:$0xf]
  %v139 = vld [vmem:[%s1 + $0x190] sm:$0xf]
  %v140 = vld [vmem:[%s1 + $0x194] sm:$0xf]
  %v141 = vld [vmem:[%s1 + $0x198] sm:$0xf]
  %v142 = vld [vmem:[%s1 + $0x19c] sm:$0xf]
  %v143 = vld [vmem:[%s1 + $0x1a0] sm:$0xf]
  %v144 = vld [vmem:[%s1 + $0x1a4] sm:$0xf]
  %v145 = vld [vmem:[%s1 + $0x1a8] sm:$0xf]
  %v146 = vld [vmem:[%s1 + $0x1ac] sm:$0xf]
  %v147 = vld [vmem:[%s1 + $0x1b0] sm:$0xf]
  %v148 = vld [vmem:[%s1 + $0x1b4] sm:$0xf]
  %v149 = vld [vmem:[%s1 + $0x1b8] sm:$0xf]
  %v150 = vld [vmem:[%s1 + $0x1bc] sm:$0xf]
  %v151 = vld [vmem:[%s1 + $0x1c0] sm:$0xf]
  %v152 = vld [vmem:[%s1 + $0x1c4] sm:$0xf]
  %v153 = vld [vmem:[%s1 + $0x1c8] sm:$0xf]
  %v154 = vld [vmem:[%s1 + $0x1cc] sm:$0xf]
  %v155 = vld [vmem:[%s1 + $0x1d0] sm:$0xf]
  %v156 = vld [vmem:[%s1 + $0x1d4] sm:$0xf]
  %v157 = vld [vmem:[%s1 + $0x1d8] sm:$0xf]
  %v158 = vld [vmem:[%s1 + $0x1dc] sm:$0xf]
  %v159 = vld [vmem:[%s1 + $0x1e0] sm:$0xf]
  %v160 = vld [vmem:[%s1 + $0x1e4] sm:$0xf]
  %v161 = vld [vmem:[%s1 + $0x1e8] sm:$0xf]
  %v162 = vld [vmem:[%s1 + $0x1ec] sm:$0xf]
  %v163 = vld [vmem:[%s1 + $0x1f0] sm:$0xf]
  %v164 = vld [vmem:[%s1 + $0x1f4] sm:$0xf]
  %v165 = vld [vmem:[%s1 + $0x1f8] sm:$0xf]
  %v166 = vld [vmem:[%s1 + $0x1fc] sm:$0xf]
  %v167 = vld [vmem:[%s1 + $0x200] sm:$0xf]
  %v168 = vld [vmem:[%s1 + $0x204] sm:$0xf]
  %v169 = vld [vmem:[%s1 + $0x208] sm:$0xf]
  %v170 = vld [vmem:[%s1 + $0x20c] sm:$0xf]
  %v171 = vld [vmem:[%s1 + $0x210] sm:$0xf]
  %v172 = vld [vmem:[%s1 + $0x214] sm:$0xf]
  %v173 = vld [vmem:[%s1 + $0x218] sm:$0xf]
  %v174 = vld [vmem:[%s1 + $0x21c] sm:$0xf]
  %v175 = vld [vmem:[%s1 + $0x220] sm:$0xf]
  %v176 = vld [vmem:[%s1 + $0x224] sm:$0xf]
  %v177 = vld [vmem:[%s1 + $0x228] sm:$0xf]
  %v178 = vld [vmem:[%s1 + $0x22c] sm:$0xf]
  %v179 = vld [vmem:[%s1 + $0x230] sm:$0xf]
  %v180 = vld [vmem:[%s1 + $0x234] sm:$0xf]
  %v181 = vld [vmem:[%s1 + $0x238] sm:$0xf]
  %v182 = vld [vmem:[%s1 + $0x23c] sm:$0xf]
  %v183 = vld [vmem:[%s1 + $0x240] sm:$0xf]
  %v184 = vld [vmem:[%s1 + $0x244] sm:$0xf]
  %v185 = vld [vmem:[%s1 + $0x248] sm:$0xf]
  %v186 = vld [vmem:[%s1 + $0x24c] sm:$0xf]
  %v187 = vld [vmem:[%s1 + $0x250] sm:$0xf]
  %v188 = vld [vmem:[%s1 + $0x254] sm:$0xf]
  %v189 = vld [vmem:[%s1 + $0x258] sm:$0xf]
  %v190 = vld [vmem:[%s1 + $0x25c] sm:$0xf]
  %v191 = vld [vmem:[%s1 + $0x260] sm:$0xf]
  %v192 = vld [vmem:[%s1 + $0x264] sm:$0xf]
  %v193 = vld [vmem:[%s1 + $0x268] sm:$0xf]
  %v194 = vld [vmem:[%s1 + $0x26c] sm:$0xf]
  %v195 = vld [vmem:[%s1 + $0x270] sm:$0xf]
  %v196 = vld [vmem:[%s1 + $0x274] sm:$0xf]
  %v197 = vld [vmem:[%s1 + $0x278] sm:$0xf]
  %v198 = vld [vmem:[%s1 + $0x27c] sm:$0xf]
  %v199 = vld [vmem:[%s1 + $0x280] sm:$0xf]
  %v200 = vld [vmem:[%s1 + $0x284] sm:$0xf]
  %v201 = vld [vmem:[%s1 + $0x288] sm:$0xf]
  %v202 = vld [vmem:[%s1 + $0x28c] sm:$0xf]
  %v203 = vld [vmem:[%s1 + $0x290] sm:$0xf]
  %v204 = vld [vmem:[%s1 + $0x294] sm:$0xf]
  %v205 = vld [vmem:[%s1 + $0x298] sm:$0xf]
  %v206 = vld [vmem:[%s1 + $0x29c] sm:$0xf]
  %v207 = vld [vmem:[%s1 + $0x2a0] sm:$0xf]
  %v208 = vld [vmem:[%s1 + $0x2a4] sm:$0xf]
  %v209 = vld [vmem:[%s1 + $0x2a8] sm:$0xf]
  %v210 = vld [vmem:[%s1 + $0x2ac] sm:$0xf]
  %v211 = vld [vmem:[%s1 + $0x2b0] sm:$0xf]
  %v212 = vld [vmem:[%s1 + $0x2b4] sm:$0xf]
  %v213 = vld [vmem:[%s1 + $0x2b8] sm:$0xf]
  %v214 = vld [vmem:[%s1 + $0x2bc] sm:$0xf]
  %v215 = vld [vmem:[%s1 + $0x2c0] sm:$0xf]
  %v216 = vld [vmem:[%s1 + $0x2c4] sm:$0xf]
  %v217 = vld [vmem:[%s1 + $0x2c8] sm:$0xf]
  %v218 = vld [vmem:[%s1 + $0x2cc] sm:$0xf]
  %v219 = vld [vmem:[%s1 + $0x2d0] sm:$0xf]
  %v220 = vld [vmem:[%s1 + $0x2d4] sm:$0xf]
  %v221 = vld [vmem:[%s1 + $0x2d8] sm:$0xf]
  %v222 = vld [vmem:[%s1 + $0x2dc] sm:$0xf]
  %v223 = vld [vmem:[%s1 + $0x2e0] sm:$0xf]
  %v224 = vld [vmem:[%s1 + $0x2e4] sm:$0xf]
  %v225 = vld [vmem:[%s1 + $0x2e8] sm:$0xf]
  %v226 = vld [vmem:[%s1 + $0x2ec] sm:$0xf]
  %v227 = vld [vmem:[%s1 + $0x2f0] sm:$0xf]
  %v228 = vld [vmem:[%s1 + $0x2f4] sm:$0xf]
  %v229 = vld [vmem:[%s1 + $0x2f8] sm:$0xf]
  %v230 = vld [vmem:[%s1 + $0x2fc] sm:$0xf]
  %v231 = vld [vmem:[%s2] sm:$0x1]
  %v233 = vlaneseq
  %v234 = vshrl.u32 %v233, 7
  %v235 = vsub.s32 0, %v234
  %v236 = vrot.slane %v231, %v235
  %v250 = vunpack.c.l.b16 %v27
  %v251 = vunpack.c.h.b16 %v27
  %v252 = vunpack.c.l.b16 %v28
  %v253 = vunpack.c.h.b16 %v28
  %v254 = vunpack.c.l.b16 %v29
  %v255 = vunpack.c.h.b16 %v29
  %v256 = vunpack.c.l.b16 %v30
  %v257 = vunpack.c.h.b16 %v30
  %v258 = vunpack.c.l.b16 %v31
  %v259 = vunpack.c.h.b16 %v31
  %v260 = vunpack.c.l.b16 %v32
  %v261 = vunpack.c.h.b16 %v32
  %v262 = vunpack.c.l.b16 %v33
  %v263 = vunpack.c.h.b16 %v33
  %v264 = vunpack.c.l.b16 %v34
  %v265 = vunpack.c.h.b16 %v34
  %v266 = vunpack.c.l.b16 %v35
  %v267 = vunpack.c.h.b16 %v35
  %v268 = vunpack.c.l.b16 %v36
  %v269 = vunpack.c.h.b16 %v36
  %v270 = vunpack.c.l.b16 %v37
  %v271 = vunpack.c.h.b16 %v37
  %v272 = vunpack.c.l.b16 %v38
  %v273 = vunpack.c.h.b16 %v38
  %v274 = vpack.c.b16 %v262, %v250
  %v275 = vpack.c.b16 %v263, %v251
  %v276 = vpack.c.b16 %v264, %v252
  %v277 = vpack.c.b16 %v265, %v253
  %v278 = vpack.c.b16 %v266, %v254
  %v279 = vpack.c.b16 %v267, %v255
  %v280 = vpack.c.b16 %v268, %v256
  %v281 = vpack.c.b16 %v269, %v257
  %v282 = vpack.c.b16 %v270, %v258
  %v283 = vpack.c.b16 %v271, %v259
  %v284 = vpack.c.b16 %v272, %v260
  %v285 = vpack.c.b16 %v273, %v261
  %v490 = vunpack.c.l.b16 %v39
  %v491 = vunpack.c.l.b16 %v40
  %v492 = vunpack.c.l.b16 %v41
  %v493 = vunpack.c.l.b16 %v42
  %v494 = vunpack.c.l.b16 %v43
  %v495 = vunpack.c.l.b16 %v44
  %v496 = vunpack.c.l.b16 %v45
  %v497 = vunpack.c.l.b16 %v46
  %v498 = vunpack.c.l.b16 %v47
  %v499 = vunpack.c.l.b16 %v48
  %v500 = vunpack.c.l.b16 %v49
  %v501 = vunpack.c.l.b16 %v50
  %v502 = vunpack.c.l.b16 %v51
  %v503 = vunpack.c.l.b16 %v52
  %v504 = vunpack.c.l.b16 %v53
  %v505 = vunpack.c.l.b16 %v54
  %v506 = vunpack.c.l.b16 %v55
  %v507 = vunpack.c.l.b16 %v56
  %v508 = vunpack.c.l.b16 %v57
  %v509 = vunpack.c.l.b16 %v58
  %v510 = vunpack.c.l.b16 %v59
  %v511 = vunpack.c.l.b16 %v60
  %v512 = vunpack.c.l.b16 %v61
  %v513 = vunpack.c.l.b16 %v62
  %v514 = vunpack.c.l.b16 %v63
  %v515 = vunpack.c.l.b16 %v64
  %v516 = vunpack.c.l.b16 %v65
  %v517 = vunpack.c.l.b16 %v66
  %v518 = vunpack.c.l.b16 %v67
  %v519 = vunpack.c.l.b16 %v68
  %v520 = vunpack.c.l.b16 %v69
  %v521 = vunpack.c.l.b16 %v70
  %v522 = vunpack.c.l.b16 %v71
  %v523 = vunpack.c.l.b16 %v72
  %v524 = vunpack.c.l.b16 %v73
  %v525 = vunpack.c.l.b16 %v74
  %v526 = vunpack.c.l.b16 %v75
  %v527 = vunpack.c.l.b16 %v76
  %v528 = vunpack.c.l.b16 %v77
  %v529 = vunpack.c.l.b16 %v78
  %v530 = vunpack.c.l.b16 %v79
  %v531 = vunpack.c.l.b16 %v80
  %v532 = vunpack.c.l.b16 %v81
  %v533 = vunpack.c.l.b16 %v82
  %v534 = vunpack.c.l.b16 %v83
  %v535 = vunpack.c.l.b16 %v84
  %v536 = vunpack.c.l.b16 %v85
  %v537 = vunpack.c.l.b16 %v86
  %v538 = vunpack.c.l.b16 %v87
  %v539 = vunpack.c.l.b16 %v88
  %v540 = vunpack.c.l.b16 %v89
  %v541 = vunpack.c.l.b16 %v90
  %v542 = vunpack.c.l.b16 %v91
  %v543 = vunpack.c.l.b16 %v92
  %v544 = vunpack.c.l.b16 %v93
  %v545 = vunpack.c.l.b16 %v94
  %v546 = vunpack.c.l.b16 %v95
  %v547 = vunpack.c.l.b16 %v96
  %v548 = vunpack.c.l.b16 %v97
  %v549 = vunpack.c.l.b16 %v98
  %v550 = vunpack.c.l.b16 %v99
  %v551 = vunpack.c.l.b16 %v100
  %v552 = vunpack.c.l.b16 %v101
  %v553 = vunpack.c.l.b16 %v102
  %v554 = vunpack.c.l.b16 %v103
  %v555 = vunpack.c.l.b16 %v104
  %v556 = vunpack.c.l.b16 %v105
  %v557 = vunpack.c.l.b16 %v106
  %v558 = vunpack.c.l.b16 %v107
  %v559 = vunpack.c.l.b16 %v108
  %v560 = vunpack.c.l.b16 %v109
  %v561 = vunpack.c.l.b16 %v110
  %v562 = vunpack.c.l.b16 %v111
  %v563 = vunpack.c.l.b16 %v112
  %v564 = vunpack.c.l.b16 %v113
  %v565 = vunpack.c.l.b16 %v114
  %v566 = vunpack.c.l.b16 %v115
  %v567 = vunpack.c.l.b16 %v116
  %v568 = vunpack.c.l.b16 %v117
  %v569 = vunpack.c.l.b16 %v118
  %v570 = vunpack.c.l.b16 %v119
  %v571 = vunpack.c.l.b16 %v120
  %v572 = vunpack.c.l.b16 %v121
  %v573 = vunpack.c.l.b16 %v122
  %v574 = vunpack.c.l.b16 %v123
  %v575 = vunpack.c.l.b16 %v124
  %v576 = vunpack.c.l.b16 %v125
  %v577 = vunpack.c.l.b16 %v126
  %v578 = vunpack.c.l.b16 %v127
  %v579 = vunpack.c.l.b16 %v128
  %v580 = vunpack.c.l.b16 %v129
  %v581 = vunpack.c.l.b16 %v130
  %v582 = vunpack.c.l.b16 %v131
  %v583 = vunpack.c.l.b16 %v132
  %v584 = vunpack.c.l.b16 %v133
  %v585 = vunpack.c.l.b16 %v134
  %v586 = vunpack.c.l.b16 %v135
  %v587 = vunpack.c.l.b16 %v136
  %v588 = vunpack.c.l.b16 %v137
  %v589 = vunpack.c.l.b16 %v138
  %v590 = vunpack.c.l.b16 %v139
  %v591 = vunpack.c.l.b16 %v140
  %v592 = vunpack.c.l.b16 %v141
  %v593 = vunpack.c.l.b16 %v142
  %v594 = vunpack.c.l.b16 %v143
  %v595 = vunpack.c.l.b16 %v144
  %v596 = vunpack.c.l.b16 %v145
  %v597 = vunpack.c.l.b16 %v146
  %v598 = vunpack.c.l.b16 %v147
  %v599 = vunpack.c.l.b16 %v148
  %v600 = vunpack.c.l.b16 %v149
  %v601 = vunpack.c.l.b16 %v150
  %v602 = vunpack.c.l.b16 %v151
  %v603 = vunpack.c.l.b16 %v152
  %v604 = vunpack.c.l.b16 %v153
  %v605 = vunpack.c.l.b16 %v154
  %v606 = vunpack.c.l.b16 %v155
  %v607 = vunpack.c.l.b16 %v156
  %v608 = vunpack.c.l.b16 %v157
  %v609 = vunpack.c.l.b16 %v158
  %v610 = vunpack.c.l.b16 %v159
  %v611 = vunpack.c.l.b16 %v160
  %v612 = vunpack.c.l.b16 %v161
  %v613 = vunpack.c.l.b16 %v162
  %v614 = vunpack.c.l.b16 %v163
  %v615 = vunpack.c.l.b16 %v164
  %v616 = vunpack.c.l.b16 %v165
  %v617 = vunpack.c.l.b16 %v166
  %v618 = vunpack.c.l.b16 %v167
  %v619 = vunpack.c.l.b16 %v168
  %v620 = vunpack.c.l.b16 %v169
  %v621 = vunpack.c.l.b16 %v170
  %v622 = vunpack.c.l.b16 %v171
  %v623 = vunpack.c.l.b16 %v172
  %v624 = vunpack.c.l.b16 %v173
  %v625 = vunpack.c.l.b16 %v174
  %v626 = vunpack.c.l.b16 %v175
  %v627 = vunpack.c.l.b16 %v176
  %v628 = vunpack.c.l.b16 %v177
  %v629 = vunpack.c.l.b16 %v178
  %v630 = vunpack.c.l.b16 %v179
  %v631 = vunpack.c.l.b16 %v180
  %v632 = vunpack.c.l.b16 %v181
  %v633 = vunpack.c.l.b16 %v182
  %v634 = vunpack.c.l.b16 %v183
  %v635 = vunpack.c.l.b16 %v184
  %v636 = vunpack.c.l.b16 %v185
  %v637 = vunpack.c.l.b16 %v186
  %v638 = vunpack.c.l.b16 %v187
  %v639 = vunpack.c.l.b16 %v188
  %v640 = vunpack.c.l.b16 %v189
  %v641 = vunpack.c.l.b16 %v190
  %v642 = vunpack.c.l.b16 %v191
  %v643 = vunpack.c.l.b16 %v192
  %v644 = vunpack.c.l.b16 %v193
  %v645 = vunpack.c.l.b16 %v194
  %v646 = vunpack.c.l.b16 %v195
  %v647 = vunpack.c.l.b16 %v196
  %v648 = vunpack.c.l.b16 %v197
  %v649 = vunpack.c.l.b16 %v198
  %v650 = vunpack.c.l.b16 %v199
  %v651 = vunpack.c.l.b16 %v200
  %v652 = vunpack.c.l.b16 %v201
  %v653 = vunpack.c.l.b16 %v202
  %v654 = vunpack.c.l.b16 %v203
  %v655 = vunpack.c.l.b16 %v204
  %v656 = vunpack.c.l.b16 %v205
  %v657 = vunpack.c.l.b16 %v206
  %v658 = vunpack.c.l.b16 %v207
  %v659 = vunpack.c.l.b16 %v208
  %v660 = vunpack.c.l.b16 %v209
  %v661 = vunpack.c.l.b16 %v210
  %v662 = vunpack.c.l.b16 %v211
  %v663 = vunpack.c.l.b16 %v212
  %v664 = vunpack.c.l.b16 %v213
  %v665 = vunpack.c.l.b16 %v214
  %v666 = vunpack.c.l.b16 %v215
  %v667 = vunpack.c.l.b16 %v216
  %v668 = vunpack.c.l.b16 %v217
  %v669 = vunpack.c.l.b16 %v218
  %v670 = vunpack.c.l.b16 %v219
  %v671 = vunpack.c.l.b16 %v220
  %v672 = vunpack.c.l.b16 %v221
  %v673 = vunpack.c.l.b16 %v222
  %v674 = vunpack.c.l.b16 %v223
  %v675 = vunpack.c.l.b16 %v224
  %v676 = vunpack.c.l.b16 %v225
  %v677 = vunpack.c.l.b16 %v226
  %v678 = vunpack.c.l.b16 %v227
  %v679 = vunpack.c.l.b16 %v228
  %v680 = vunpack.c.l.b16 %v229
  %v681 = vunpack.c.l.b16 %v230
  %v682 = vpack.c.b16 %v491, %v490
  %v683 = vpack.c.b16 %v493, %v492
  %v684 = vpack.c.b16 %v495, %v494
  %v685 = vpack.c.b16 %v497, %v496
  %v686 = vpack.c.b16 %v499, %v498
  %v687 = vpack.c.b16 %v501, %v500
  %v688 = vpack.c.b16 %v503, %v502
  %v689 = vpack.c.b16 %v505, %v504
  %v690 = vpack.c.b16 %v507, %v506
  %v691 = vpack.c.b16 %v509, %v508
  %v692 = vpack.c.b16 %v511, %v510
  %v693 = vpack.c.b16 %v513, %v512
  %v694 = vpack.c.b16 %v515, %v514
  %v695 = vpack.c.b16 %v517, %v516
  %v696 = vpack.c.b16 %v519, %v518
  %v697 = vpack.c.b16 %v521, %v520
  %v698 = vpack.c.b16 %v523, %v522
  %v699 = vpack.c.b16 %v525, %v524
  %v700 = vpack.c.b16 %v527, %v526
  %v701 = vpack.c.b16 %v529, %v528
  %v702 = vpack.c.b16 %v531, %v530
  %v703 = vpack.c.b16 %v533, %v532
  %v704 = vpack.c.b16 %v535, %v534
  %v705 = vpack.c.b16 %v537, %v536
  %v706 = vpack.c.b16 %v539, %v538
  %v707 = vpack.c.b16 %v541, %v540
  %v708 = vpack.c.b16 %v543, %v542
  %v709 = vpack.c.b16 %v545, %v544
  %v710 = vpack.c.b16 %v547, %v546
  %v711 = vpack.c.b16 %v549, %v548
  %v712 = vpack.c.b16 %v551, %v550
  %v713 = vpack.c.b16 %v553, %v552
  %v714 = vpack.c.b16 %v555, %v554
  %v715 = vpack.c.b16 %v557, %v556
  %v716 = vpack.c.b16 %v559, %v558
  %v717 = vpack.c.b16 %v561, %v560
  %v718 = vpack.c.b16 %v563, %v562
  %v719 = vpack.c.b16 %v565, %v564
  %v720 = vpack.c.b16 %v567, %v566
  %v721 = vpack.c.b16 %v569, %v568
  %v722 = vpack.c.b16 %v571, %v570
  %v723 = vpack.c.b16 %v573, %v572
  %v724 = vpack.c.b16 %v575, %v574
  %v725 = vpack.c.b16 %v577, %v576
  %v726 = vpack.c.b16 %v579, %v578
  %v727 = vpack.c.b16 %v581, %v580
  %v728 = vpack.c.b16 %v583, %v582
  %v729 = vpack.c.b16 %v585, %v584
  %v730 = vpack.c.b16 %v587, %v586
  %v731 = vpack.c.b16 %v589, %v588
  %v732 = vpack.c.b16 %v591, %v590
  %v733 = vpack.c.b16 %v593, %v592
  %v734 = vpack.c.b16 %v595, %v594
  %v735 = vpack.c.b16 %v597, %v596
  %v736 = vpack.c.b16 %v599, %v598
  %v737 = vpack.c.b16 %v601, %v600
  %v738 = vpack.c.b16 %v603, %v602
  %v739 = vpack.c.b16 %v605, %v604
  %v740 = vpack.c.b16 %v607, %v606
  %v741 = vpack.c.b16 %v609, %v608
  %v742 = vpack.c.b16 %v611, %v610
  %v743 = vpack.c.b16 %v613, %v612
  %v744 = vpack.c.b16 %v615, %v614
  %v745 = vpack.c.b16 %v617, %v616
  %v746 = vpack.c.b16 %v619, %v618
  %v747 = vpack.c.b16 %v621, %v620
  %v748 = vpack.c.b16 %v623, %v622
  %v749 = vpack.c.b16 %v625, %v624
  %v750 = vpack.c.b16 %v627, %v626
  %v751 = vpack.c.b16 %v629, %v628
  %v752 = vpack.c.b16 %v631, %v630
  %v753 = vpack.c.b16 %v633, %v632
  %v754 = vpack.c.b16 %v635, %v634
  %v755 = vpack.c.b16 %v637, %v636
  %v756 = vpack.c.b16 %v639, %v638
  %v757 = vpack.c.b16 %v641, %v640
  %v758 = vpack.c.b16 %v643, %v642
  %v759 = vpack.c.b16 %v645, %v644
  %v760 = vpack.c.b16 %v647, %v646
  %v761 = vpack.c.b16 %v649, %v648
  %v762 = vpack.c.b16 %v651, %v650
  %v763 = vpack.c.b16 %v653, %v652
  %v764 = vpack.c.b16 %v655, %v654
  %v765 = vpack.c.b16 %v657, %v656
  %v766 = vpack.c.b16 %v659, %v658
  %v767 = vpack.c.b16 %v661, %v660
  %v768 = vpack.c.b16 %v663, %v662
  %v769 = vpack.c.b16 %v665, %v664
  %v770 = vpack.c.b16 %v667, %v666
  %v771 = vpack.c.b16 %v669, %v668
  %v772 = vpack.c.b16 %v671, %v670
  %v773 = vpack.c.b16 %v673, %v672
  %v774 = vpack.c.b16 %v675, %v674
  %v775 = vpack.c.b16 %v677, %v676
  %v776 = vpack.c.b16 %v679, %v678
  %v777 = vpack.c.b16 %v681, %v680
  %874 = vmatprep.subr.bf16.mxu0 0
  %875 = vmatpush1.bf16.msra.mxu0 %v689
  %876 = vmatprep.subr.bf16.mxu0 0
  %877 = vmatpush1.bf16.msra.mxu0 %v688
  %878 = vmatprep.subr.bf16.mxu0 0
  %879 = vmatpush1.bf16.msra.mxu0 %v687
  %880 = vmatprep.subr.bf16.mxu0 0
  %881 = vmatpush1.bf16.msra.mxu0 %v686
  %882 = vmatprep.subr.bf16.mxu0 0
  %883 = vmatpush1.bf16.msra.mxu0 %v685
  %884 = vmatprep.subr.bf16.mxu0 0
  %885 = vmatpush1.bf16.msra.mxu0 %v684
  %886 = vmatprep.subr.bf16.mxu0 0
  %887 = vmatpush1.bf16.msra.mxu0 %v683
  %888 = vmatprep.subr.bf16.mxu0 0
  %889 = vmatpush1.bf16.msra.mxu0 %v682
  %890 = vmatprep.subr.bf16.mxu0 0
  %891 = vmatpush2.bf16.msra.mxu0 %v697
  %892 = vmatprep.subr.bf16.mxu0 0
  %893 = vmatpush2.bf16.msra.mxu0 %v696
  %894 = vmatprep.subr.bf16.mxu0 0
  %895 = vmatpush2.bf16.msra.mxu0 %v695
  %896 = vmatprep.subr.bf16.mxu0 0
  %897 = vmatpush2.bf16.msra.mxu0 %v694
  %898 = vmatprep.subr.bf16.mxu0 0
  %899 = vmatpush2.bf16.msra.mxu0 %v693
  %900 = vmatprep.subr.bf16.mxu0 0
  %901 = vmatpush2.bf16.msra.mxu0 %v692
  %902 = vmatprep.subr.bf16.mxu0 0
  %903 = vmatpush2.bf16.msra.mxu0 %v691
  %904 = vmatprep.subr.bf16.mxu0 0
  %905 = vmatpush2.bf16.msra.mxu0 %v690
  %906 = vmatprep.mubr.bf16.mxu0 %v275
  %907 = vmatmul.mubr.bf16.gmra.mxu0 %v274
  %v908 = vpop.f32.mrf.mxu0
  %v909 = vadd.f32 %v236, %v908
  %v910 = vpop.f32.mrf.mxu0
  %v911 = vpop.f32.mrf.mxu0
  %v912 = vadd.f32 %v236, %v911
  %v913 = vpop.f32.mrf.mxu0
  %914 = vdwg.mxu0
  %915 = vmatprep.subr.bf16.mxu0 0
  %916 = vmatpush1.bf16.msra.mxu0 %v705
  %917 = vmatprep.subr.bf16.mxu0 0
  %918 = vmatpush1.bf16.msra.mxu0 %v704
  %919 = vmatprep.subr.bf16.mxu0 0
  %920 = vmatpush1.bf16.msra.mxu0 %v703
  %921 = vmatprep.subr.bf16.mxu0 0
  %922 = vmatpush1.bf16.msra.mxu0 %v702
  %923 = vmatprep.subr.bf16.mxu0 0
  %924 = vmatpush1.bf16.msra.mxu0 %v701
  %925 = vmatprep.subr.bf16.mxu0 0
  %926 = vmatpush1.bf16.msra.mxu0 %v700
  %927 = vmatprep.subr.bf16.mxu0 0
  %928 = vmatpush1.bf16.msra.mxu0 %v699
  %929 = vmatprep.subr.bf16.mxu0 0
  %930 = vmatpush1.bf16.msra.mxu0 %v698
  %931 = vmatprep.subr.bf16.mxu0 0
  %932 = vmatpush2.bf16.msra.mxu0 %v713
  %933 = vmatprep.subr.bf16.mxu0 0
  %934 = vmatpush2.bf16.msra.mxu0 %v712
  %935 = vmatprep.subr.bf16.mxu0 0
  %936 = vmatpush2.bf16.msra.mxu0 %v711
  %937 = vmatprep.subr.bf16.mxu0 0
  %938 = vmatpush2.bf16.msra.mxu0 %v710
  %939 = vmatprep.subr.bf16.mxu0 0
  %940 = vmatpush2.bf16.msra.mxu0 %v709
  %941 = vmatprep.subr.bf16.mxu0 0
  %942 = vmatpush2.bf16.msra.mxu0 %v708
  %943 = vmatprep.subr.bf16.mxu0 0
  %944 = vmatpush2.bf16.msra.mxu0 %v707
  %945 = vmatprep.subr.bf16.mxu0 0
  %946 = vmatpush2.bf16.msra.mxu0 %v706
  %947 = vmatprep.mubr.bf16.mxu0 %v277
  %948 = vmatmul.mubr.bf16.gmra.mxu0 %v276
  %v949 = vpop.f32.mrf.mxu0
  %v950 = vadd.f32 %v909, %v949
  %v951 = vpop.f32.mrf.mxu0
  %v952 = vpop.f32.mrf.mxu0
  %v953 = vadd.f32 %v912, %v952
  %v954 = vpop.f32.mrf.mxu0
  %955 = vdwg.mxu0
  %956 = vmatprep.subr.bf16.mxu0 0
  %957 = vmatpush1.bf16.msra.mxu0 %v721
  %958 = vmatprep.subr.bf16.mxu0 0
  %959 = vmatpush1.bf16.msra.mxu0 %v720
  %960 = vmatprep.subr.bf16.mxu0 0
  %961 = vmatpush1.bf16.msra.mxu0 %v719
  %962 = vmatprep.subr.bf16.mxu0 0
  %963 = vmatpush1.bf16.msra.mxu0 %v718
  %964 = vmatprep.subr.bf16.mxu0 0
  %965 = vmatpush1.bf16.msra.mxu0 %v717
  %966 = vmatprep.subr.bf16.mxu0 0
  %967 = vmatpush1.bf16.msra.mxu0 %v716
  %968 = vmatprep.subr.bf16.mxu0 0
  %969 = vmatpush1.bf16.msra.mxu0 %v715
  %970 = vmatprep.subr.bf16.mxu0 0
  %971 = vmatpush1.bf16.msra.mxu0 %v714
  %972 = vmatprep.subr.bf16.mxu0 0
  %973 = vmatpush2.bf16.msra.mxu0 %v729
  %974 = vmatprep.subr.bf16.mxu0 0
  %975 = vmatpush2.bf16.msra.mxu0 %v728
  %976 = vmatprep.subr.bf16.mxu0 0
  %977 = vmatpush2.bf16.msra.mxu0 %v727
  %978 = vmatprep.subr.bf16.mxu0 0
  %979 = vmatpush2.bf16.msra.mxu0 %v726
  %980 = vmatprep.subr.bf16.mxu0 0
  %981 = vmatpush2.bf16.msra.mxu0 %v725
  %982 = vmatprep.subr.bf16.mxu0 0
  %983 = vmatpush2.bf16.msra.mxu0 %v724
  %984 = vmatprep.subr.bf16.mxu0 0
  %985 = vmatpush2.bf16.msra.mxu0 %v723
  %986 = vmatprep.subr.bf16.mxu0 0
  %987 = vmatpush2.bf16.msra.mxu0 %v722
  %988 = vmatprep.mubr.bf16.mxu0 %v279
  %989 = vmatmul.mubr.bf16.gmra.mxu0 %v278
  %v990 = vpop.f32.mrf.mxu0
  %v991 = vadd.f32 %v950, %v990
  %v992 = vpop.f32.mrf.mxu0
  %v993 = vpop.f32.mrf.mxu0
  %v994 = vadd.f32 %v953, %v993
  %v995 = vpop.f32.mrf.mxu0
  %996 = vdwg.mxu0
  %997 = vmatprep.subr.bf16.mxu0 0
  %998 = vmatpush1.bf16.msra.mxu0 %v737
  %999 = vmatprep.subr.bf16.mxu0 0
  %1000 = vmatpush1.bf16.msra.mxu0 %v736
  %1001 = vmatprep.subr.bf16.mxu0 0
  %1002 = vmatpush1.bf16.msra.mxu0 %v735
  %1003 = vmatprep.subr.bf16.mxu0 0
  %1004 = vmatpush1.bf16.msra.mxu0 %v734
  %1005 = vmatprep.subr.bf16.mxu0 0
  %1006 = vmatpush1.bf16.msra.mxu0 %v733
  %1007 = vmatprep.subr.bf16.mxu0 0
  %1008 = vmatpush1.bf16.msra.mxu0 %v732
  %1009 = vmatprep.subr.bf16.mxu0 0
  %1010 = vmatpush1.bf16.msra.mxu0 %v731
  %1011 = vmatprep.subr.bf16.mxu0 0
  %1012 = vmatpush1.bf16.msra.mxu0 %v730
  %1013 = vmatprep.subr.bf16.mxu0 0
  %1014 = vmatpush2.bf16.msra.mxu0 %v745
  %1015 = vmatprep.subr.bf16.mxu0 0
  %1016 = vmatpush2.bf16.msra.mxu0 %v744
  %1017 = vmatprep.subr.bf16.mxu0 0
  %1018 = vmatpush2.bf16.msra.mxu0 %v743
  %1019 = vmatprep.subr.bf16.mxu0 0
  %1020 = vmatpush2.bf16.msra.mxu0 %v742
  %1021 = vmatprep.subr.bf16.mxu0 0
  %1022 = vmatpush2.bf16.msra.mxu0 %v741
  %1023 = vmatprep.subr.bf16.mxu0 0
  %1024 = vmatpush2.bf16.msra.mxu0 %v740
  %1025 = vmatprep.subr.bf16.mxu0 0
  %1026 = vmatpush2.bf16.msra.mxu0 %v739
  %1027 = vmatprep.subr.bf16.mxu0 0
  %1028 = vmatpush2.bf16.msra.mxu0 %v738
  %1029 = vmatprep.mubr.bf16.mxu0 %v281
  %1030 = vmatmul.mubr.bf16.gmra.mxu0 %v280
  %v1031 = vpop.f32.mrf.mxu0
  %v1032 = vadd.f32 %v991, %v1031
  %v1033 = vpop.f32.mrf.mxu0
  %v1034 = vpop.f32.mrf.mxu0
  %v1035 = vadd.f32 %v994, %v1034
  %v1036 = vpop.f32.mrf.mxu0
  %1037 = vdwg.mxu0
  %1038 = vmatprep.subr.bf16.mxu0 0
  %1039 = vmatpush1.bf16.msra.mxu0 %v753
  %1040 = vmatprep.subr.bf16.mxu0 0
  %1041 = vmatpush1.bf16.msra.mxu0 %v752
  %1042 = vmatprep.subr.bf16.mxu0 0
  %1043 = vmatpush1.bf16.msra.mxu0 %v751
  %1044 = vmatprep.subr.bf16.mxu0 0
  %1045 = vmatpush1.bf16.msra.mxu0 %v750
  %1046 = vmatprep.subr.bf16.mxu0 0
  %1047 = vmatpush1.bf16.msra.mxu0 %v749
  %1048 = vmatprep.subr.bf16.mxu0 0
  %1049 = vmatpush1.bf16.msra.mxu0 %v748
  %1050 = vmatprep.subr.bf16.mxu0 0
  %1051 = vmatpush1.bf16.msra.mxu0 %v747
  %1052 = vmatprep.subr.bf16.mxu0 0
  %1053 = vmatpush1.bf16.msra.mxu0 %v746
  %1054 = vmatprep.subr.bf16.mxu0 0
  %1055 = vmatpush2.bf16.msra.mxu0 %v761
  %1056 = vmatprep.subr.bf16.mxu0 0
  %1057 = vmatpush2.bf16.msra.mxu0 %v760
  %1058 = vmatprep.subr.bf16.mxu0 0
  %1059 = vmatpush2.bf16.msra.mxu0 %v759
  %1060 = vmatprep.subr.bf16.mxu0 0
  %1061 = vmatpush2.bf16.msra.mxu0 %v758
  %1062 = vmatprep.subr.bf16.mxu0 0
  %1063 = vmatpush2.bf16.msra.mxu0 %v757
  %1064 = vmatprep.subr.bf16.mxu0 0
  %1065 = vmatpush2.bf16.msra.mxu0 %v756
  %1066 = vmatprep.subr.bf16.mxu0 0
  %1067 = vmatpush2.bf16.msra.mxu0 %v755
  %1068 = vmatprep.subr.bf16.mxu0 0
  %1069 = vmatpush2.bf16.msra.mxu0 %v754
  %1070 = vmatprep.mubr.bf16.mxu0 %v283
  %1071 = vmatmul.mubr.bf16.gmra.mxu0 %v282
  %v1072 = vpop.f32.mrf.mxu0
  %v1073 = vadd.f32 %v1032, %v1072
  %v1074 = vpop.f32.mrf.mxu0
  %v1075 = vpop.f32.mrf.mxu0
  %v1076 = vadd.f32 %v1035, %v1075
  %v1077 = vpop.f32.mrf.mxu0
  %1078 = vdwg.mxu0
  %1079 = vmatprep.subr.bf16.mxu0 0
  %1080 = vmatpush1.bf16.msra.mxu0 %v769
  %1081 = vmatprep.subr.bf16.mxu0 0
  %1082 = vmatpush1.bf16.msra.mxu0 %v768
  %1083 = vmatprep.subr.bf16.mxu0 0
  %1084 = vmatpush1.bf16.msra.mxu0 %v767
  %1085 = vmatprep.subr.bf16.mxu0 0
  %1086 = vmatpush1.bf16.msra.mxu0 %v766
  %1087 = vmatprep.subr.bf16.mxu0 0
  %1088 = vmatpush1.bf16.msra.mxu0 %v765
  %1089 = vmatprep.subr.bf16.mxu0 0
  %1090 = vmatpush1.bf16.msra.mxu0 %v764
  %1091 = vmatprep.subr.bf16.mxu0 0
  %1092 = vmatpush1.bf16.msra.mxu0 %v763
  %1093 = vmatprep.subr.bf16.mxu0 0
  %1094 = vmatpush1.bf16.msra.mxu0 %v762
  %1095 = vmatprep.subr.bf16.mxu0 0
  %1096 = vmatpush2.bf16.msra.mxu0 %v777
  %1097 = vmatprep.subr.bf16.mxu0 0
  %1098 = vmatpush2.bf16.msra.mxu0 %v776
  %1099 = vmatprep.subr.bf16.mxu0 0
  %1100 = vmatpush2.bf16.msra.mxu0 %v775
  %1101 = vmatprep.subr.bf16.mxu0 0
  %1102 = vmatpush2.bf16.msra.mxu0 %v774
  %1103 = vmatprep.subr.bf16.mxu0 0
  %1104 = vmatpush2.bf16.msra.mxu0 %v773
  %1105 = vmatprep.subr.bf16.mxu0 0
  %1106 = vmatpush2.bf16.msra.mxu0 %v772
  %1107 = vmatprep.subr.bf16.mxu0 0
  %1108 = vmatpush2.bf16.msra.mxu0 %v771
  %1109 = vmatprep.subr.bf16.mxu0 0
  %1110 = vmatpush2.bf16.msra.mxu0 %v770
  %1111 = vmatprep.mubr.bf16.mxu0 %v285
  %1112 = vmatmul.mubr.bf16.gmra.mxu0 %v284
  %v1113 = vpop.f32.mrf.mxu0
  %v1114 = vadd.f32 %v1073, %v1113
  %v1115 = vpop.f32.mrf.mxu0
  %v1116 = vpop.f32.mrf.mxu0
  %v1117 = vadd.f32 %v1076, %v1116
  %v1118 = vpop.f32.mrf.mxu0
  %1119 = vdwg.mxu0
  %v1120 = vmax.f32 %v1114, 0.0
  %v1121 = vmax.f32 %v1117, 0.0
  %v1122 = vpack.c.bf16 %v1121, %v1120
  %v1123 = vld [vmem:[%s3] sm:$0xf]
  %v1124 = vld [vmem:[%s3 + $0x4] sm:$0xf]
  %v1125 = vld [vmem:[%s3 + $0x8] sm:$0xf]
  %v1126 = vld [vmem:[%s3 + $0xc] sm:$0xf]
  %v1127 = vld [vmem:[%s3 + $0x10] sm:$0xf]
  %v1128 = vld [vmem:[%s3 + $0x14] sm:$0xf]
  %v1129 = vld [vmem:[%s3 + $0x18] sm:$0xf]
  %v1130 = vld [vmem:[%s3 + $0x1c] sm:$0xf]
  %v1131 = vld [vmem:[%s4] sm:$0x1]
  %v1133 = vlaneseq
  %v1134 = vshrl.u32 %v1133, 7
  %v1135 = vsub.s32 0, %v1134
  %v1136 = vrot.slane %v1131, %v1135
  %v1146 = vunpack.c.l.b16 %v1123
  %v1147 = vunpack.c.l.b16 %v1124
  %v1148 = vunpack.c.l.b16 %v1125
  %v1149 = vunpack.c.l.b16 %v1126
  %v1150 = vunpack.c.l.b16 %v1127
  %v1151 = vunpack.c.l.b16 %v1128
  %v1152 = vunpack.c.l.b16 %v1129
  %v1153 = vunpack.c.l.b16 %v1130
  %v1154 = vpack.c.b16 %v1147, %v1146
  %v1155 = vpack.c.b16 %v1149, %v1148
  %v1156 = vpack.c.b16 %v1151, %v1150
  %v1157 = vpack.c.b16 %v1153, %v1152
  %vm1162 = vcmask 523264
  %v1164 = vsel %vm1162, %v1122, 0
  %1166 = vmatprep.subr.bf16.mxu0 0
  %1167 = vmatpush1.bf16.msra.mxu0 0
  %1168 = vmatprep.subr.bf16.mxu0 0
  %1169 = vmatpush1.bf16.msra.mxu0 0
  %1170 = vmatprep.subr.bf16.mxu0 0
  %1171 = vmatpush1.bf16.msra.mxu0 0
  %1172 = vmatprep.subr.bf16.mxu0 0
  %1173 = vmatpush1.bf16.msra.mxu0 0
  %1174 = vmatprep.subr.bf16.mxu0 0
  %1175 = vmatpush1.bf16.msra.mxu0 %v1157
  %1176 = vmatprep.subr.bf16.mxu0 0
  %1177 = vmatpush1.bf16.msra.mxu0 %v1156
  %1178 = vmatprep.subr.bf16.mxu0 0
  %1179 = vmatpush1.bf16.msra.mxu0 %v1155
  %1180 = vmatprep.subr.bf16.mxu0 0
  %1181 = vmatpush1.bf16.msra.mxu0 %v1154
  %1182 = vmatprep.subr.bf16.mxu0 0
  %1183 = vmatpush2.bf16.msra.mxu0 0
  %1184 = vmatprep.subr.bf16.mxu0 0
  %1185 = vmatpush2.bf16.msra.mxu0 0
  %1186 = vmatprep.subr.bf16.mxu0 0
  %1187 = vmatpush2.bf16.msra.mxu0 0
  %1188 = vmatprep.subr.bf16.mxu0 0
  %1189 = vmatpush2.bf16.msra.mxu0 0
  %1190 = vmatprep.subr.bf16.mxu0 0
  %1191 = vmatpush2.bf16.msra.mxu0 0
  %1192 = vmatprep.subr.bf16.mxu0 0
  %1193 = vmatpush2.bf16.msra.mxu0 0
  %1194 = vmatprep.subr.bf16.mxu0 0
  %1195 = vmatpush2.bf16.msra.mxu0 0
  %1196 = vmatprep.subr.bf16.mxu0 0
  %1197 = vmatpush2.bf16.msra.mxu0 0
  %1198 = vmatprep.mubr.bf16.mxu0 0
  %1199 = vmatmul.mubr.bf16.gmra.mxu0 %v1164
  %v1200 = vpop.f32.mrf.mxu0
  %v1201 = vadd.f32 %v1136, %v1200
  %v1202 = vpop.f32.mrf.mxu0
  %v1203 = vpop.f32.mrf.mxu0
  %v1204 = vadd.f32 %v1136, %v1203
  %v1205 = vpop.f32.mrf.mxu0
  %1206 = vdwg.mxu0
  %v1207 = vmax.f32 %v1201, 0.0
  %v1208 = vmax.f32 %v1204, 0.0
  %v1209 = vpack.c.bf16 %v1208, %v1207
  %v1210 = vld [vmem:[%s5] sm:$0xf]
  %v1211 = vld [vmem:[%s5 + $0x4] sm:$0xf]
  %v1212 = vld [vmem:[%s5 + $0x8] sm:$0xf]
  %v1213 = vld [vmem:[%s5 + $0xc] sm:$0xf]
  %v1214 = vld [vmem:[%s6] sm:$0x1]
  %v1216 = vlaneseq
  %v1217 = vshrl.u32 %v1216, 7
  %v1218 = vsub.s32 0, %v1217
  %v1219 = vrot.slane %v1214, %v1218
  %v1225 = vunpack.c.l.b16 %v1210
  %v1226 = vunpack.c.l.b16 %v1211
  %v1227 = vunpack.c.l.b16 %v1212
  %v1228 = vunpack.c.l.b16 %v1213
  %v1229 = vpack.c.b16 %v1226, %v1225
  %v1230 = vpack.c.b16 %v1228, %v1227
  %vm1233 = vcmask 261120
  %v1235 = vsel %vm1233, %v1209, 0
  %1237 = vmatprep.subr.bf16.mxu0 0
  %1238 = vmatpush1.bf16.msra.mxu0 0
  %1239 = vmatprep.subr.bf16.mxu0 0
  %1240 = vmatpush1.bf16.msra.mxu0 0
  %1241 = vmatprep.subr.bf16.mxu0 0
  %1242 = vmatpush1.bf16.msra.mxu0 0
  %1243 = vmatprep.subr.bf16.mxu0 0
  %1244 = vmatpush1.bf16.msra.mxu0 0
  %1245 = vmatprep.subr.bf16.mxu0 0
  %1246 = vmatpush1.bf16.msra.mxu0 0
  %1247 = vmatprep.subr.bf16.mxu0 0
  %1248 = vmatpush1.bf16.msra.mxu0 0
  %1249 = vmatprep.subr.bf16.mxu0 0
  %1250 = vmatpush1.bf16.msra.mxu0 %v1230
  %1251 = vmatprep.subr.bf16.mxu0 0
  %1252 = vmatpush1.bf16.msra.mxu0 %v1229
  %1253 = vmatprep.subr.bf16.mxu0 0
  %1254 = vmatpush2.bf16.msra.mxu0 0
  %1255 = vmatprep.subr.bf16.mxu0 0
  %1256 = vmatpush2.bf16.msra.mxu0 0
  %1257 = vmatprep.subr.bf16.mxu0 0
  %1258 = vmatpush2.bf16.msra.mxu0 0
  %1259 = vmatprep.subr.bf16.mxu0 0
  %1260 = vmatpush2.bf16.msra.mxu0 0
  %1261 = vmatprep.subr.bf16.mxu0 0
  %1262 = vmatpush2.bf16.msra.mxu0 0
  %1263 = vmatprep.subr.bf16.mxu0 0
  %1264 = vmatpush2.bf16.msra.mxu0 0
  %1265 = vmatprep.subr.bf16.mxu0 0
  %1266 = vmatpush2.bf16.msra.mxu0 0
  %1267 = vmatprep.subr.bf16.mxu0 0
  %1268 = vmatpush2.bf16.msra.mxu0 0
  %1269 = vmatprep.mubr.bf16.mxu0 0
  %1270 = vmatmul.mubr.bf16.gmra.mxu0 %v1235
  %v1271 = vpop.f32.mrf.mxu0
  %v1272 = vadd.f32 %v1219, %v1271
  %v1273 = vpop.f32.mrf.mxu0
  %v1274 = vpop.f32.mrf.mxu0
  %v1275 = vadd.f32 %v1219, %v1274
  %v1276 = vpop.f32.mrf.mxu0
  %1277 = vdwg.mxu0
  %vm1278 = vcmask 15360
  %1279 = vst.msk [vmem:[%s7] sm:$0xff] %vm1278, %v1272
  %1280 = vst.msk [vmem:[%s7 + $0x8] sm:$0xff] %vm1278, %v1275
  // Predicated region
  $region30: #{tpu_custom_call.1} parent=0 // pred_check
    _
  $region31: #{tpu_custom_call.1} parent=0 // pred_check_branch
    %1282 = sbr.rel (0) target = $region33
  $region32: #{tpu_custom_call.1} parent=0 // pred_region
    _
  $region33: #{tpu_custom_call.1} parent=0 // pred_fallthru
    _
  // Predicated region
  $region34: #{tpu_custom_call.1} parent=0 // pred_check
    _
  $region35: #{tpu_custom_call.1} parent=0 // pred_check_branch
    %1284 = sbr.rel (0) target = $region37
  $region36: #{tpu_custom_call.1} parent=0 // pred_region
    _
  $region37: #{tpu_custom_call.1} parent=0 // pred_fallthru
    _

</llo_original>
